<compile_context>
chip_gen: v6e
topology: v6e:2x2x1
jax: 0.10.0
libtpu: 0.0.40
codegen_flags: <defaults>
</compile_context>

<pallas_src>
import numpy as np

import jax
import jax.numpy as jnp
from jax.experimental import pallas as pl
from jax.experimental.pallas import tpu as pltpu


def _round_up(a, b):
    return (a + b - 1) // b * b


def _tensorcores_per_device():
    """Best-effort guess of TensorCores sharing one JAX device (megacore/dual-TC)."""
    try:
        kind = jax.devices()[0].device_kind.lower()
    except Exception:
        return 1
    if ("v4" in kind) or ("v5p" in kind) or ("v7" in kind) or ("7x" in kind):
        return 2
    return 1


def _make_mlp_kernel(acc_in_out):
    """Build the fused Mlp kernel body.

    acc_in_out=True  -> output block is f32 and doubles as the accumulator.
    acc_in_out=False -> accumulate into f32 VMEM scratch, cast on final store.
    """

    def kernel(scale_ref, bias_ref, x_ref, w1_ref, w2_ref, w2sum_ref, o_ref,
               *scratch):
        j = pl.program_id(1)                     # hidden (reduction) axis
        acc_ref = o_ref if acc_in_out else scratch[0]

        @pl.when(j == 0)
        def _():
            acc_ref[...] = jnp.zeros_like(acc_ref)

        # fc1 slab: (tm, dim) @ (dim, th) -> (tm, th); bf16 operands, f32 acc.
        h = jnp.dot(x_ref[...], w1_ref[...], preferred_element_type=jnp.float32)

        # StarReLU with scale/bias folded out of the inner loop: accumulate
        # relu(h)^2 @ W2 here, apply s*acc + b*colsum(W2) in the epilogue.
        r = jnp.maximum(h, 0.0)
        rr = (r * r).astype(w2_ref.dtype)

        # fc2 partial product, accumulated over hidden tiles (f32, resident).
        acc_ref[...] += jnp.dot(rr, w2_ref[...],
                                preferred_element_type=jnp.float32)

        @pl.when(j == pl.num_programs(1) - 1)
        def _():
            y = scale_ref[0] * acc_ref[...] + bias_ref[0] * w2sum_ref[...]
            o_ref[...] = y.astype(o_ref.dtype)

    return kernel


def mlp_forward(x, w1, w2, scale, bias, *, tm_target=512, th_target=512,
                mxu_dtype=jnp.bfloat16):
    """MetaFormer Mlp forward: y = fc2(StarReLU(fc1(x))), bias=False, drop=0.0.

    x:     (..., dim)
    w1:    (dim, hidden)  == fc1.weight.T
    w2:    (hidden, out)  == fc2.weight.T
    scale, bias: shape-(1,) f32 StarReLU parameters.

    Note: dim/out should be >= 128 (ideally multiples of 256 on v6e/v7x) for
    lane-dense stores. Sub-128 feature widths (as in the toy self-test) are
    correct but use masked partial stores and are not the performance path.
    Numerics: MXU operands are bf16 (accumulation f32), which slightly
    perturbs results vs. an all-f32 PyTorch forward.
    """
    orig_shape = x.shape
    dim = x.shape[-1]
    hidden = w1.shape[1]
    out_f = w2.shape[1]
    assert w1.shape[0] == dim and w2.shape[0] == hidden

    out_dtype = x.dtype
    acc_in_out = (out_dtype == jnp.float32)   # accumulate straight into o_ref

    # Lane-dense (tokens, dim) slab; pure view, no HBM copy.
    x2d = x.reshape(-1, dim)
    m = x2d.shape[0]

    # --- hidden (reduction) tiling: fixed th, zero-pad hidden if needed -----
    hid_p = _round_up(hidden, 128)
    th = min(th_target, hid_p)
    th = max(128, (th // 128) * 128)          # lane constraint on W1's last dim
    hid_p = _round_up(hidden, th)

    # --- MXU operand dtype: bf16 everywhere, f32 accumulation ---------------
    xm = x2d.astype(mxu_dtype)
    w1m = w1.astype(mxu_dtype)
    w2m = w2.astype(mxu_dtype)
    if hid_p != hidden:
        # Zero-padded W1 columns give relu(0)^2 == 0 and zero W2 rows add
        # nothing, so results are unchanged (bias handled via colsum below).
        w1m = jnp.pad(w1m, ((0, 0), (0, hid_p - hidden)))
        w2m = jnp.pad(w2m, ((0, hid_p - hidden), (0, 0)))

    # Column sums of the ORIGINAL W2 rows -> bias term applied once: b*colsum.
    w2sum = jnp.sum(w2.astype(jnp.float32), axis=0, keepdims=True)   # (1, out)

    scale = jnp.asarray(scale, jnp.float32).reshape(1)
    bias = jnp.asarray(bias, jnp.float32).reshape(1)

    # --- token tiling --------------------------------------------------------
    if m > tm_target:
        tm = tm_target
    elif m >= 16 and _tensorcores_per_device() >= 2:
        # >=2 token tiles so the "parallel" axis shards across both TCs.
        tm = _round_up(pl.cdiv(m, 2), 8)
    else:
        tm = m

    # --- chip-aware VMEM budget (conservative for v7x's 64 MiB/TC) ----------
    try:
        vmem_cap = int(pltpu.get_tpu_info().vmem_capacity_bytes)
    except Exception:
        vmem_cap = 64 * 1024 * 1024
    budget = int(vmem_cap * 0.6)

    mxu_bytes = np.dtype(mxu_dtype).itemsize
    out_bytes = np.dtype(out_dtype).itemsize

    def vmem_estimate(tm_):
        est = 2 * (tm_ * dim + dim * th + th * out_f) * mxu_bytes   # dbl-buf ins
        est += 2 * tm_ * out_f * out_bytes                          # dbl-buf out
        est += 2 * out_f * 4                                        # colsum(W2)
        if not acc_in_out:
            est += tm_ * out_f * 4                                  # acc scratch
        return est

    while tm > 64 and vmem_estimate(tm) > budget:
        tm = max(64, _round_up(tm // 2, 8))

    grid = (pl.cdiv(m, tm), hid_p // th)

    kernel = _make_mlp_kernel(acc_in_out)
    scratch_shapes = [] if acc_in_out else [pltpu.VMEM((tm, out_f), jnp.float32)]

    flops = 2 * m * dim * hid_p + 2 * m * hid_p * out_f
    bytes_accessed = int(xm.size * mxu_bytes + w1m.size * mxu_bytes
                         + w2m.size * mxu_bytes + w2sum.size * 4
                         + m * out_f * out_bytes)
    vmem_limit = int(min(vmem_cap * 3 // 4,
                         max(32 * 1024 * 1024, 2 * vmem_estimate(tm))))

    out2d = pl.pallas_call(
        kernel,
        out_shape=jax.ShapeDtypeStruct((m, out_f), out_dtype),
        grid=grid,
        in_specs=[
            pl.BlockSpec(memory_space=pltpu.MemorySpace.SMEM),    # scale (f32)
            pl.BlockSpec(memory_space=pltpu.MemorySpace.SMEM),    # bias  (f32)
            pl.BlockSpec((tm, dim), lambda i, j: (i, 0)),         # x token tile
            pl.BlockSpec((dim, th), lambda i, j: (0, j)),         # W1 hidden slab
            pl.BlockSpec((th, out_f), lambda i, j: (j, 0)),       # W2 hidden slab
            pl.BlockSpec((1, out_f), lambda i, j: (0, 0)),        # colsum(W2)
        ],
        out_specs=pl.BlockSpec((tm, out_f), lambda i, j: (i, 0)),
        scratch_shapes=scratch_shapes,
        compiler_params=pltpu.CompilerParams(
            dimension_semantics=("parallel", "arbitrary"),
            vmem_limit_bytes=vmem_limit,
        ),
        cost_estimate=pl.CostEstimate(flops=flops, transcendentals=0,
                                      bytes_accessed=bytes_accessed),
    )(scale, bias, xm, w1m, w2m, w2sum)

    return out2d.reshape(*orig_shape[:-1], out_f)


def _ref_bf16(x2d, w1, w2, s, b, mdt=jnp.bfloat16):
    """Reference with the same bf16-operand / f32-accum math as the kernel."""
    h = jnp.dot(x2d.astype(mdt), w1.astype(mdt),
                preferred_element_type=jnp.float32)
    r = jnp.maximum(h, 0.0)
    acc = jnp.dot((r * r).astype(mdt), w2.astype(mdt),
                  preferred_element_type=jnp.float32)
    return s[0] * acc + b[0] * jnp.sum(w2.astype(jnp.float32), axis=0)


if __name__ == "__main__":
    key = jax.random.PRNGKey(0)
    kx, k1, k2, kx2, k3, k4 = jax.random.split(key, 6)

    # --- Test 1: Mlp(dim=32, mlp_ratio=4), (B=2, N=8, dim=32), f32 ----------
    B, N, dim = 2, 8, 32
    hidden = 4 * dim                                   # 128
    x = jax.random.normal(kx, (B, N, dim), dtype=jnp.float32)
    w1 = jax.random.normal(k1, (dim, hidden), dtype=jnp.float32) / jnp.sqrt(dim)
    w2 = jax.random.normal(k2, (hidden, dim), dtype=jnp.float32) / jnp.sqrt(hidden)
    scale = jnp.full((1,), 1.0, jnp.float32)           # StarReLU defaults
    bias = jnp.full((1,), 0.0, jnp.float32)

    y = jax.block_until_ready(mlp_forward(x, w1, w2, scale, bias))

    y_b16 = _ref_bf16(x.reshape(-1, dim), w1, w2, scale, bias).reshape(B, N, dim)
    h32 = x @ w1
    y_f32 = (scale[0] * jnp.maximum(h32, 0.0) ** 2 + bias[0]) @ w2

    assert y.shape == (B, N, dim) and y.dtype == x.dtype
    # tight vs. same-math bf16 reference, loose vs. all-f32 module reference
    assert jnp.allclose(y, y_b16, atol=2e-3, rtol=2e-3)
    assert jnp.allclose(y, y_f32, atol=1e-1, rtol=1e-1)

    # --- Test 2: non-divisible hidden (padded), multi j-tile, bf16 I/O ------
    dim2, hidden2, out2 = 48, 200, 64                  # hidden pads 200 -> 256
    x2 = jax.random.normal(kx2, (2, 8, dim2), dtype=jnp.bfloat16)
    w1b = (jax.random.normal(k3, (dim2, hidden2), jnp.float32)
           / jnp.sqrt(dim2)).astype(jnp.bfloat16)
    w2b = (jax.random.normal(k4, (hidden2, out2), jnp.float32)
           / jnp.sqrt(hidden2)).astype(jnp.bfloat16)
    scale2 = jnp.full((1,), 0.8944, jnp.float32)
    bias2 = jnp.full((1,), -0.4472, jnp.float32)

    y2 = jax.block_until_ready(
        mlp_forward(x2, w1b, w2b, scale2, bias2, th_target=128))
    y2_ref = _ref_bf16(x2.reshape(-1, dim2), w1b, w2b,
                       scale2, bias2).reshape(2, 8, out2)
    assert y2.shape == (2, 8, out2) and y2.dtype == jnp.bfloat16
    assert jnp.allclose(y2.astype(jnp.float32), y2_ref, atol=2e-2, rtol=2e-2)

    print("KERNEL_OK")
</pallas_src>

<mosaic_0001>
module attributes {stable_mosaic.version = 11 : i64} {
  func.func @kernel(%arg0: i32, %arg1: i32, %arg2: memref<1xf32, #tpu.memory_space<smem>>, %arg3: memref<1xf32, #tpu.memory_space<smem>>, %arg4: memref<16x32xbf16, #tpu.memory_space<vmem>>, %arg5: memref<32x128xbf16, #tpu.memory_space<vmem>>, %arg6: memref<128x32xbf16, #tpu.memory_space<vmem>>, %arg7: memref<1x32xf32, #tpu.memory_space<vmem>>, %arg8: memref<16x32xf32, #tpu.memory_space<vmem>>) attributes {dimension_semantics = [#tpu.dimension_semantics<parallel>, #tpu.dimension_semantics<arbitrary>], iteration_bounds = array<i64: 1, 1>, scalar_prefetch = 0 : i64, scratch_operands = 0 : i64, tpu.core_type = #tpu.core_type<tc>, window_params = [{transform_indices = @transform_0, window_bounds = array<i64: 1>}, {transform_indices = @transform_1, window_bounds = array<i64: 1>}, {transform_indices = @transform_2, window_bounds = array<i64: 16, 32>}, {transform_indices = @transform_3, window_bounds = array<i64: 32, 128>}, {transform_indices = @transform_4, window_bounds = array<i64: 128, 32>}, {pipeline_mode = #tpu.pipeline_mode<synchronous>, transform_indices = @transform_5, window_bounds = array<i64: 1, 32>}, {transform_indices = @transform_6, window_bounds = array<i64: 16, 32>}]} {
    %c0_i32 = arith.constant 0 : i32
    %0 = arith.cmpi eq, %arg1, %c0_i32 : i32
    %1 = arith.extui %0 : i1 to i32
    %c0_i32_0 = arith.constant 0 : i32
    %2 = arith.cmpi ne, %1, %c0_i32_0 : i32
    scf.if %2 {
      %cst_14 = arith.constant 0.000000e+00 : f32
      %18 = vector.broadcast %cst_14 : f32 to vector<16x32xf32>
      %c0_15 = arith.constant 0 : index
      %c0_16 = arith.constant 0 : index
      %19 = vector.load %arg8[%c0_15, %c0_16] : memref<16x32xf32, #tpu.memory_space<vmem>>, vector<16x32xf32>
      tpu.vector_store %arg8[%c0_15, %c0_16], %18 {strides = array<i32>} : memref<16x32xf32, #tpu.memory_space<vmem>>, vector<16x32xf32>,
    } else {
    }
    %c0 = arith.constant 0 : index
    %c0_1 = arith.constant 0 : index
    %3 = vector.load %arg4[%c0, %c0_1] : memref<16x32xbf16, #tpu.memory_space<vmem>>, vector<16x32xbf16>
    %c0_2 = arith.constant 0 : index
    %c0_3 = arith.constant 0 : index
    %4 = vector.load %arg5[%c0_2, %c0_3] : memref<32x128xbf16, #tpu.memory_space<vmem>>, vector<32x128xbf16>
    %cst = arith.constant dense<0.000000e+00> : vector<16x128xf32>
    %5 = tpu.matmul %3, %4, %cst {dimension_numbers = #tpu.dot_dimension_numbers<[1], [0], [0], [1], [0, 0, 1, 1], [], []>} : vector<16x32xbf16>, vector<32x128xbf16>, vector<16x128xf32> -> vector<16x128xf32>
    %cst_4 = arith.constant 0.000000e+00 : f32
    %6 = vector.broadcast %cst_4 : f32 to vector<16x128xf32>
    %7 = arith.maximumf %5, %6 : vector<16x128xf32>
    %8 = arith.mulf %7, %7 : vector<16x128xf32>
    %9 = arith.truncf %8 : vector<16x128xf32> to vector<16x128xbf16>
    %c0_5 = arith.constant 0 : index
    %c0_6 = arith.constant 0 : index
    %10 = vector.load %arg8[%c0_5, %c0_6] : memref<16x32xf32, #tpu.memory_space<vmem>>, vector<16x32xf32>
    %c0_7 = arith.constant 0 : index
    %c0_8 = arith.constant 0 : index
    %11 = vector.load %arg6[%c0_7, %c0_8] : memref<128x32xbf16, #tpu.memory_space<vmem>>, vector<128x32xbf16>
    %cst_9 = arith.constant dense<0.000000e+00> : vector<16x32xf32>
    %12 = tpu.matmul %9, %11, %cst_9 {dimension_numbers = #tpu.dot_dimension_numbers<[1], [0], [0], [1], [0, 0, 1, 1], [], []>} : vector<16x128xbf16>, vector<128x32xbf16>, vector<16x32xf32> -> vector<16x32xf32>
    %13 = arith.addf %10, %12 : vector<16x32xf32>
    %c0_10 = arith.constant 0 : index
    %c0_11 = arith.constant 0 : index
    %14 = vector.load %arg8[%c0_10, %c0_11] : memref<16x32xf32, #tpu.memory_space<vmem>>, vector<16x32xf32>
    tpu.vector_store %arg8[%c0_10, %c0_11], %13 {strides = array<i32>} : memref<16x32xf32, #tpu.memory_space<vmem>>, vector<16x32xf32>,
    %c0_i32_12 = arith.constant 0 : i32
    %15 = arith.cmpi eq, %arg1, %c0_i32_12 : i32
    %16 = arith.extui %15 : i1 to i32
    %c0_i32_13 = arith.constant 0 : i32
    %17 = arith.cmpi ne, %16, %c0_i32_13 : i32
    scf.if %17 {
      %c0_14 = arith.constant 0 : index
      %18 = memref.load %arg2[%c0_14] : memref<1xf32, #tpu.memory_space<smem>>
      %c0_15 = arith.constant 0 : index
      %c0_16 = arith.constant 0 : index
      %19 = vector.load %arg8[%c0_15, %c0_16] : memref<16x32xf32, #tpu.memory_space<vmem>>, vector<16x32xf32>
      %20 = vector.broadcast %18 : f32 to vector<16x32xf32>
      %21 = arith.mulf %20, %19 : vector<16x32xf32>
      %c0_17 = arith.constant 0 : index
      %22 = memref.load %arg3[%c0_17] : memref<1xf32, #tpu.memory_space<smem>>
      %c0_18 = arith.constant 0 : index
      %c0_19 = arith.constant 0 : index
      %23 = vector.load %arg7[%c0_18, %c0_19] : memref<1x32xf32, #tpu.memory_space<vmem>>, vector<1x32xf32>
      %24 = vector.broadcast %22 : f32 to vector<1x32xf32>
      %25 = arith.mulf %24, %23 : vector<1x32xf32>
      %26 = vector.broadcast %25 : vector<1x32xf32> to vector<16x32xf32>
      %27 = arith.addf %21, %26 : vector<16x32xf32>
      %c0_20 = arith.constant 0 : index
      %c0_21 = arith.constant 0 : index
      %28 = vector.load %arg8[%c0_20, %c0_21] : memref<16x32xf32, #tpu.memory_space<vmem>>, vector<16x32xf32>
      tpu.vector_store %arg8[%c0_20, %c0_21], %27 {strides = array<i32>} : memref<16x32xf32, #tpu.memory_space<vmem>>, vector<16x32xf32>,
    } else {
    }
    return
  }
  func.func @transform_0(%arg0: i32, %arg1: i32) -> i32 {
    %c0_i32 = arith.constant 0 : i32
    %c0_i32_0 = arith.constant 0 : i32
    return %c0_i32 : i32
  }
  func.func @transform_1(%arg0: i32, %arg1: i32) -> i32 {
    %c0_i32 = arith.constant 0 : i32
    %c0_i32_0 = arith.constant 0 : i32
    return %c0_i32 : i32
  }
  func.func @transform_2(%arg0: i32, %arg1: i32) -> (i32, i32) {
    %c0_i32 = arith.constant 0 : i32
    %c0_i32_0 = arith.constant 0 : i32
    return %arg0, %c0_i32 : i32, i32
  }
  func.func @transform_3(%arg0: i32, %arg1: i32) -> (i32, i32) {
    %c0_i32 = arith.constant 0 : i32
    %c0_i32_0 = arith.constant 0 : i32
    return %c0_i32, %arg1 : i32, i32
  }
  func.func @transform_4(%arg0: i32, %arg1: i32) -> (i32, i32) {
    %c0_i32 = arith.constant 0 : i32
    %c0_i32_0 = arith.constant 0 : i32
    return %arg1, %c0_i32 : i32, i32
  }
  func.func @transform_5(%arg0: i32, %arg1: i32) -> (i32, i32) {
    %c0_i32 = arith.constant 0 : i32
    %c0_i32_0 = arith.constant 0 : i32
    %c0_i32_1 = arith.constant 0 : i32
    return %c0_i32, %c0_i32_0 : i32, i32
  }
  func.func @transform_6(%arg0: i32, %arg1: i32) -> (i32, i32) {
    %c0_i32 = arith.constant 0 : i32
    %c0_i32_0 = arith.constant 0 : i32
    return %arg0, %c0_i32 : i32, i32
  }
}

</mosaic_0001>

<llo_original>
// kernel: tpu_custom_call.1
$region0: #{tpu_custom_call.1}
  #allocation0 [shape = 'u32[]', space=smem, size = 0x4, offset = 0x4, fixed_abs, tag = 'smem constant byte address 0x4 - core index']
  #allocation1 [shape = 'u32[144,128]{1,0:T(1,128)}', space=vmem, size = 0x12000, scoped, tag = 'internal scratch']
  #allocation2 [shape = 'f32[1]{0:T(128)S(6)}', space=smem, size = 0x200, scoped, tag = 'scoped memory for tpu_custom_call.1']
  #allocation3 [shape = 'f32[1]{0:T(128)S(6)}', space=smem, size = 0x200, scoped, tag = 'scoped memory for tpu_custom_call.1']
  %s0 = inlined_call_operand.<no memory space> [shape: f32[1], index: 0, kind: input, shape index: {}]
  %s1 = inlined_call_operand.<no memory space> [shape: f32[1], index: 1, kind: input, shape index: {}]
  %s2 = inlined_call_operand.vmem [shape: bf16[16,32], index: 2, kind: input, shape index: {}]
  %s3 = inlined_call_operand.vmem [shape: bf16[32,128], index: 3, kind: input, shape index: {}]
  %s4 = inlined_call_operand.vmem [shape: bf16[128,32], index: 4, kind: input, shape index: {}]
  %s5 = inlined_call_operand.vmem [shape: f32[1,32], index: 5, kind: input, shape index: {}]
  %s6 = inlined_call_operand.hbm [shape: f32[16,32], index: 6, kind: output, shape index: {}]
  %s7 = sld [smem:[#allocation0]]
  $region42: #{tpu_custom_call.1} parent=0
    _
  %s9 = ssub.s32 1, %s7
  %s10 = scalar_select 0, %s9, %s7
  %11 = sst [smem:[#allocation2]] %s0
  %12 = sst [smem:[#allocation3]] %s1
  $region1: #{tpu_custom_call.1} parent=0
    #allocation4 [shape = 'u8[8192]{0}', space=vmem, size = 0x2000, scoped, tag = 'output window, operand 0, single buffered']
    #allocation5 [shape = 's32[1]{0}', space=sflag, size = 0x4, scoped, tag = 'scoped memory for tpu_custom_call.1']
    %13 = vsyncpa [#allocation5], 0
    // Predicated region
    $region2: #{tpu_custom_call.1} parent=1 // pred_check
      _
    $region3: #{tpu_custom_call.1} parent=1 // pred_check_branch
      %15 = sbr.rel (0) target = $region5
    $region4: #{tpu_custom_call.1} parent=1 // pred_region
      _
    $region5: #{tpu_custom_call.1} parent=1 // pred_fallthru
      _
    // Predicated region
    $region6: #{tpu_custom_call.1} parent=1 // pred_check
      _
    $region7: #{tpu_custom_call.1} parent=1 // pred_check_branch
      %17 = sbr.rel (0) target = $region9
    $region8: #{tpu_custom_call.1} parent=1 // pred_region
      _
    $region9: #{tpu_custom_call.1} parent=1 // pred_fallthru
      _
    // Predicated region
    $region10: #{tpu_custom_call.1} parent=1 // pred_check
      _
    $region11: #{tpu_custom_call.1} parent=1 // pred_check_branch
      %19 = sbr.rel (0) target = $region13
    $region12: #{tpu_custom_call.1} parent=1 // pred_region
      _
    $region13: #{tpu_custom_call.1} parent=1 // pred_fallthru
      _
    // Predicated region
    $region14: #{tpu_custom_call.1} parent=1 // pred_check
      _
    $region15: #{tpu_custom_call.1} parent=1 // pred_check_branch
      %21 = sbr.rel (0) target = $region17
    $region16: #{tpu_custom_call.1} parent=1 // pred_region
      _
    $region17: #{tpu_custom_call.1} parent=1 // pred_fallthru
      _
    // Predicated region
    $region18: #{tpu_custom_call.1} parent=1 // pred_check
      _
    $region19: #{tpu_custom_call.1} parent=1 // pred_check_branch
      %23 = sbr.rel (0) target = $region21
    $region20: #{tpu_custom_call.1} parent=1 // pred_region
      _
    $region21: #{tpu_custom_call.1} parent=1 // pred_fallthru
      _
    // Predicated region
    $region22: #{tpu_custom_call.1} parent=1 // pred_check
      _
    $region23: #{tpu_custom_call.1} parent=1 // pred_check_branch
      %25 = sbr.rel (0) target = $region25
    $region24: #{tpu_custom_call.1} parent=1 // pred_region
      _
    $region25: #{tpu_custom_call.1} parent=1 // pred_fallthru
      _
    %p27 = scmp.eq.s32.totalorder 0, 0
    // Predicated region
    $region26: #{tpu_custom_call.1} parent=1 // pred_check
      %p28 = pneg %p27
    $region27: #{tpu_custom_call.1} parent=1 // pred_check_branch
      %30 = sbr.rel (%p28) target = $region29
    $region28: #{tpu_custom_call.1} parent=1 // pred_region
      %vm31 = vcmask 261120
      %32 = vst.msk [vmem:[#allocation4] sm:$0xff] %vm31, 0.0
      %33 = vst.msk [vmem:[#allocation4 + $0x8] sm:$0xff] %vm31, 0.0
    $region29: #{tpu_custom_call.1} parent=1 // pred_fallthru
      _
    %v34 = vld [vmem:[%s2] sm:$0xf]
    %v35 = vld [vmem:[%s2 + $0x4] sm:$0xf]
    %v36 = vld [vmem:[%s3] sm:$0xf]
    %v37 = vld [vmem:[%s3 + $0x4] sm:$0xf]
    %v38 = vld [vmem:[%s3 + $0x8] sm:$0xf]
    %v39 = vld [vmem:[%s3 + $0xc] sm:$0xf]
    %v42 = vunpack.c.l.b16 %v34
    %v43 = vunpack.c.l.b16 %v35
    %v44 = vpack.c.b16 %v43, %v42
    %v49 = vunpack.c.l.b16 %v36
    %v50 = vunpack.c.l.b16 %v37
    %v51 = vunpack.c.l.b16 %v38
    %v52 = vunpack.c.l.b16 %v39
    %v53 = vpack.c.b16 %v50, %v49
    %v54 = vpack.c.b16 %v52, %v51
    %vm57 = vcmask 261120
    %v59 = vsel %vm57, %v44, 0
    %61 = vmatprep.subr.bf16.mxu0 0
    %62 = vmatpush1.bf16.msra.mxu0 0
    %63 = vmatprep.subr.bf16.mxu0 0
    %64 = vmatpush1.bf16.msra.mxu0 0
    %65 = vmatprep.subr.bf16.mxu0 0
    %66 = vmatpush1.bf16.msra.mxu0 0
    %67 = vmatprep.subr.bf16.mxu0 0
    %68 = vmatpush1.bf16.msra.mxu0 0
    %69 = vmatprep.subr.bf16.mxu0 0
    %70 = vmatpush1.bf16.msra.mxu0 0
    %71 = vmatprep.subr.bf16.mxu0 0
    %72 = vmatpush1.bf16.msra.mxu0 0
    %73 = vmatprep.subr.bf16.mxu0 0
    %74 = vmatpush1.bf16.msra.mxu0 %v54
    %75 = vmatprep.subr.bf16.mxu0 0
    %76 = vmatpush1.bf16.msra.mxu0 %v53
    %77 = vmatprep.subr.bf16.mxu0 0
    %78 = vmatpush2.bf16.msra.mxu0 0
    %79 = vmatprep.subr.bf16.mxu0 0
    %80 = vmatpush2.bf16.msra.mxu0 0
    %81 = vmatprep.subr.bf16.mxu0 0
    %82 = vmatpush2.bf16.msra.mxu0 0
    %83 = vmatprep.subr.bf16.mxu0 0
    %84 = vmatpush2.bf16.msra.mxu0 0
    %85 = vmatprep.subr.bf16.mxu0 0
    %86 = vmatpush2.bf16.msra.mxu0 0
    %87 = vmatprep.subr.bf16.mxu0 0
    %88 = vmatpush2.bf16.msra.mxu0 0
    %89 = vmatprep.subr.bf16.mxu0 0
    %90 = vmatpush2.bf16.msra.mxu0 0
    %91 = vmatprep.subr.bf16.mxu0 0
    %92 = vmatpush2.bf16.msra.mxu0 0
    %93 = vmatprep.mubr.bf16.mxu0 0
    %94 = vmatmul.mubr.bf16.gmra.mxu0 %v59
    %v95 = vpop.f32.mrf.mxu0
    %v96 = vadd.f32 0.0, %v95
    %v97 = vpop.f32.mrf.mxu0
    %v98 = vpop.f32.mrf.mxu0
    %v99 = vadd.f32 0.0, %v98
    %v100 = vpop.f32.mrf.mxu0
    %101 = vdwg.mxu0
    %v102 = vmax.f32 %v96, 0.0
    %v103 = vmax.f32 %v99, 0.0
    %v104 = vmul.f32 %v102, %v102
    %v105 = vmul.f32 %v103, %v103
    %v106 = vpack.c.bf16 %v105, %v104
    %v107 = vld [vmem:[#allocation4] sm:$0xff]
    %v108 = vld [vmem:[#allocation4 + $0x8] sm:$0xff]
    %v109 = vld [vmem:[%s4] sm:$0xf]
    %v110 = vld [vmem:[%s4 + $0x4] sm:$0xf]
    %v111 = vld [vmem:[%s4 + $0x8] sm:$0xf]
    %v112 = vld [vmem:[%s4 + $0xc] sm:$0xf]
    %v113 = vld [vmem:[%s4 + $0x10] sm:$0xf]
    %v114 = vld [vmem:[%s4 + $0x14] sm:$0xf]
    %v115 = vld [vmem:[%s4 + $0x18] sm:$0xf]
    %v116 = vld [vmem:[%s4 + $0x1c] sm:$0xf]
    %v117 = vld [vmem:[%s4 + $0x20] sm:$0xf]
    %v118 = vld [vmem:[%s4 + $0x24] sm:$0xf]
    %v119 = vld [vmem:[%s4 + $0x28] sm:$0xf]
    %v120 = vld [vmem:[%s4 + $0x2c] sm:$0xf]
    %v121 = vld [vmem:[%s4 + $0x30] sm:$0xf]
    %v122 = vld [vmem:[%s4 + $0x34] sm:$0xf]
    %v123 = vld [vmem:[%s4 + $0x38] sm:$0xf]
    %v124 = vld [vmem:[%s4 + $0x3c] sm:$0xf]
    %v141 = vunpack.c.l.b16 %v109
    %v142 = vunpack.c.l.b16 %v110
    %v143 = vunpack.c.l.b16 %v111
    %v144 = vunpack.c.l.b16 %v112
    %v145 = vunpack.c.l.b16 %v113
    %v146 = vunpack.c.l.b16 %v114
    %v147 = vunpack.c.l.b16 %v115
    %v148 = vunpack.c.l.b16 %v116
    %v149 = vunpack.c.l.b16 %v117
    %v150 = vunpack.c.l.b16 %v118
    %v151 = vunpack.c.l.b16 %v119
    %v152 = vunpack.c.l.b16 %v120
    %v153 = vunpack.c.l.b16 %v121
    %v154 = vunpack.c.l.b16 %v122
    %v155 = vunpack.c.l.b16 %v123
    %v156 = vunpack.c.l.b16 %v124
    %v157 = vpack.c.b16 %v142, %v141
    %v158 = vpack.c.b16 %v144, %v143
    %v159 = vpack.c.b16 %v146, %v145
    %v160 = vpack.c.b16 %v148, %v147
    %v161 = vpack.c.b16 %v150, %v149
    %v162 = vpack.c.b16 %v152, %v151
    %v163 = vpack.c.b16 %v154, %v153
    %v164 = vpack.c.b16 %v156, %v155
    %173 = vmatprep.subr.bf16.mxu0 0
    %174 = vmatpush1.bf16.msra.mxu0 %v164
    %175 = vmatprep.subr.bf16.mxu0 0
    %176 = vmatpush1.bf16.msra.mxu0 %v163
    %177 = vmatprep.subr.bf16.mxu0 0
    %178 = vmatpush1.bf16.msra.mxu0 %v162
    %179 = vmatprep.subr.bf16.mxu0 0
    %180 = vmatpush1.bf16.msra.mxu0 %v161
    %181 = vmatprep.subr.bf16.mxu0 0
    %182 = vmatpush1.bf16.msra.mxu0 %v160
    %183 = vmatprep.subr.bf16.mxu0 0
    %184 = vmatpush1.bf16.msra.mxu0 %v159
    %185 = vmatprep.subr.bf16.mxu0 0
    %186 = vmatpush1.bf16.msra.mxu0 %v158
    %187 = vmatprep.subr.bf16.mxu0 0
    %188 = vmatpush1.bf16.msra.mxu0 %v157
    %189 = vmatprep.subr.bf16.mxu0 0
    %190 = vmatpush2.bf16.msra.mxu0 0
    %191 = vmatprep.subr.bf16.mxu0 0
    %192 = vmatpush2.bf16.msra.mxu0 0
    %193 = vmatprep.subr.bf16.mxu0 0
    %194 = vmatpush2.bf16.msra.mxu0 0
    %195 = vmatprep.subr.bf16.mxu0 0
    %196 = vmatpush2.bf16.msra.mxu0 0
    %197 = vmatprep.subr.bf16.mxu0 0
    %198 = vmatpush2.bf16.msra.mxu0 0
    %199 = vmatprep.subr.bf16.mxu0 0
    %200 = vmatpush2.bf16.msra.mxu0 0
    %201 = vmatprep.subr.bf16.mxu0 0
    %202 = vmatpush2.bf16.msra.mxu0 0
    %203 = vmatprep.subr.bf16.mxu0 0
    %204 = vmatpush2.bf16.msra.mxu0 0
    %205 = vmatprep.mubr.bf16.mxu0 0
    %206 = vmatmul.mubr.bf16.gmra.mxu0 %v106
    %v207 = vpop.f32.mrf.mxu0
    %v208 = vadd.f32 0.0, %v207
    %v209 = vpop.f32.mrf.mxu0
    %v210 = vpop.f32.mrf.mxu0
    %v211 = vadd.f32 0.0, %v210
    %v212 = vpop.f32.mrf.mxu0
    %213 = vdwg.mxu0
    %v214 = vadd.f32 %v107, %v208
    %v215 = vadd.f32 %v108, %v211
    %216 = vst.msk [vmem:[#allocation4] sm:$0xff] %vm57, %v214
    %217 = vst.msk [vmem:[#allocation4 + $0x8] sm:$0xff] %vm57, %v215
    // Predicated region
    $region30: #{tpu_custom_call.1} parent=1 // pred_check
      %p218 = pneg %p27
    $region31: #{tpu_custom_call.1} parent=1 // pred_check_branch
      %220 = sbr.rel (%p218) target = $region33
    $region32: #{tpu_custom_call.1} parent=1 // pred_region
      %s221 = sld [smem:[#allocation2]]
      %v222 = vld [vmem:[#allocation4] sm:$0xff]
      %v223 = vld [vmem:[#allocation4 + $0x8] sm:$0xff]
      %v224 = vstv %s221
      %v225 = vmul.f32 %v224, %v222
      %v226 = vmul.f32 %v224, %v223
      %s227 = sld [smem:[#allocation3]]
      %v228 = vld [vmem:[%s5] sm:$0x1]
      %v229 = vstv %s227
      %v230 = vmul.f32 %v229, %v228
      %v232 = vlaneseq
      %v233 = vshrl.u32 %v232, 7
      %v234 = vsub.s32 0, %v233
      %v235 = vrot.slane %v230, %v234
      %v237 = vadd.f32 %v225, %v235
      %v238 = vadd.f32 %v226, %v235
      %239 = vst.msk [vmem:[#allocation4] sm:$0xff] %vm57, %v237
      %240 = vst.msk [vmem:[#allocation4 + $0x8] sm:$0xff] %vm57, %v238
    $region33: #{tpu_custom_call.1} parent=1 // pred_fallthru
      _
    // Predicated region
    $region34: #{tpu_custom_call.1} parent=1 // pred_check
      _
    $region35: #{tpu_custom_call.1} parent=1 // pred_check_branch
      %242 = sbr.rel (0) target = $region37
    $region36: #{tpu_custom_call.1} parent=1 // pred_region
      %s244 = ssub.s32 256, 256
      %245 = vsyncadd [#allocation5], %s244
      %s246 = sshll.u32 [#allocation4], 4
      %s247 = int_to_ptr.vmem [resolvable:$true] %s246
      %252 = dma.vmem_to_hbm [thread:$0]  %s247, 256, %s6, [#allocation5], 128, 128, 8
    $region37: #{tpu_custom_call.1} parent=1 // pred_fallthru
      _
    // Predicated region
    $region38: #{tpu_custom_call.1} parent=1 // pred_check
      _
    $region39: #{tpu_custom_call.1} parent=1 // pred_check_branch
      %254 = sbr.rel (0) target = $region41
    $region40: #{tpu_custom_call.1} parent=1 // pred_region
      %255 = dma.done [#allocation5], 256
    $region41: #{tpu_custom_call.1} parent=1 // pred_fallthru
      _
    %256 = vsyncpa [#allocation5], 1

</llo_original>
